<compile_context>
chip_gen: v5e
topology: v5e:2x2
jax: 0.10.0
libtpu: 0.0.40
codegen_flags: <defaults>
</compile_context>

<pallas_src>
import functools
import math

import jax
import jax.numpy as jnp
from jax.experimental import pallas as pl
from jax.experimental.pallas import tpu as pltpu


def _mha_head_kernel(q_ref, k_ref, v_ref, bias_ref,
                     wq_ref, wk_ref, wv_ref, wo_ref,
                     out_ref, acc_ref, *, scale: float, approx_recip: bool):
    """One (batch_block, head) grid step: per-head projections + attention +
    this head's slice of the output projection, accumulated over heads."""
    h = pl.program_id(1)
    bb, s, d = q_ref.shape
    d_k = wq_ref.shape[-1]
    mm_dtype = wq_ref.dtype            # MXU operand dtype (f32 or bf16)

    @pl.when(h == 0)
    def _():
        acc_ref[...] = jnp.zeros_like(acc_ref)

    # Head selection is done by the weight BlockSpecs, so there is no in-kernel
    # head split / transpose.  Activations are cast to the MXU dtype in VMEM.
    q_in = q_ref[...].reshape(bb * s, d).astype(mm_dtype)
    k_in = k_ref[...].reshape(bb * s, d).astype(mm_dtype)
    v_in = v_ref[...].reshape(bb * s, d).astype(mm_dtype)

    # nn.Linear(bias=False): y = x @ W^T; per-head columns of W^T were laid out
    # in the wrapper, so these are plain (bb*S, D) x (D, d_k) matmuls.
    qh = jnp.dot(q_in, wq_ref[...], preferred_element_type=jnp.float32) * scale
    kh = jnp.dot(k_in, wk_ref[...], preferred_element_type=jnp.float32)
    vh = jnp.dot(v_in, wv_ref[...], preferred_element_type=jnp.float32)

    qh = qh.reshape(bb, s, d_k).astype(mm_dtype)
    kh = kh.reshape(bb, s, d_k).astype(mm_dtype)
    vh = vh.reshape(bb, s, d_k).astype(mm_dtype)

    # Attention scores for this head, whole batch block at once.
    scores = jnp.einsum("bqd,bkd->bqk", qh, kh,
                        preferred_element_type=jnp.float32)       # (bb, S, S)
    scores = scores + bias_ref[...].astype(jnp.float32)           # additive mask

    # Numerically-stable softmax, f32 on the VPU/EUP.
    m = jnp.max(scores, axis=-1, keepdims=True)
    e = jnp.exp(scores - m)
    denom = jnp.sum(e, axis=-1, keepdims=True)
    if approx_recip:
        attn = e * pl.reciprocal(denom, approx=True)   # bf16 path only (EUP slot)
    else:
        attn = e / denom                               # exact on the f32 path
    # TODO(synk): attention-probability dropout omitted (eval-mode no-op).

    ctx = jnp.einsum("bqk,bkd->bqd", attn.astype(mm_dtype), vh,
                     preferred_element_type=jnp.float32)          # (bb, S, d_k)

    # "Concat heads + W_o" folded into per-head accumulation:
    #   out += ctx_h @ Wo_h,  Wo_h = (W_o^T)[h*d_k:(h+1)*d_k, :]
    acc_ref[...] += jnp.dot(ctx.reshape(bb * s, d_k).astype(mm_dtype),
                            wo_ref[...],
                            preferred_element_type=jnp.float32).reshape(bb, s, d)

    @pl.when(h == pl.num_programs(1) - 1)
    def _():
        out_ref[...] = acc_ref[...].astype(out_ref.dtype)


def _vmem_bytes_estimate(bb, S, D, d_k, in_bytes, w_bytes, out_bytes, bias_bb):
    """Rough per-step live-set estimate (double-buffered BlockSpec inputs)."""
    act = 3 * 2 * bb * S * D * in_bytes            # q, k, v blocks
    outb = 2 * bb * S * D * out_bytes              # output block
    acc = bb * S * D * 4                           # f32 accumulator scratch
    bias = 2 * bias_bb * S * S * 2                 # bf16 mask bias block
    wts = 2 * 4 * D * d_k * w_bytes                # 4 per-head weight blocks
    inter = 2 * bb * S * S * 4 + 4 * bb * S * d_k * 4   # scores/exp + qh/kh/vh/ctx
    return act + outb + acc + bias + wts + inter


def _pick_batch_block(B, S, fits):
    """VMEM-budgeted batch block.  Prefer the smallest block that fills the MXU
    M dimension (bb*S >= 256) -> deepest grid; otherwise keep >= 2 batch steps
    (v7x megacore / pipelining) with the largest block that fits."""
    divs = [d for d in range(1, B + 1) if B % d == 0]
    for bb in divs:
        if bb * S >= 256 and fits(bb):
            return bb
    for bb in reversed(divs):
        if B // bb >= 2 and fits(bb):
            return bb
    for bb in reversed(divs):
        if fits(bb):
            return bb
    return 1


def multi_head_attention(query, key, values, mask, wq, wk, wv, wo,
                         num_heads: int, *, matmul_dtype=jnp.float32,
                         batch_block: int | None = None):
    B, S, D = query.shape
    assert D % num_heads == 0, "Dim_Model is not divisible by Num_Heads"
    d_k = D // num_heads
    out_dtype = query.dtype
    mm_dtype = jnp.dtype(matmul_dtype)

    # ---- one-time weight layout plumbing (wrapper, not per grid step) ------
    # Head h of the Q/K/V projections uses columns [h*d_k, (h+1)*d_k) of W^T:
    #   (H, D, d_k).  Head h of the output projection uses rows of Wo^T:
    #   (H, d_k, D).  No transposes remain inside the kernel.
    def _qkv_heads(w):
        return (jnp.asarray(w).T.reshape(D, num_heads, d_k)
                .transpose(1, 0, 2).astype(mm_dtype))

    wq_h = _qkv_heads(wq)
    wk_h = _qkv_heads(wk)
    wv_h = _qkv_heads(wv)
    wo_h = jnp.asarray(wo).T.reshape(num_heads, d_k, D).astype(mm_dtype)

    # ---- mask -> compact bf16 additive bias (head-independent) --------------
    bias = jnp.where(jnp.asarray(mask) == 0, -1e9, 0.0).astype(jnp.bfloat16)
    while bias.ndim < 4:
        bias = bias[None]
    assert bias.shape[1] == 1, "per-head masks not supported"
    assert bias.shape[0] in (1, B), "mask batch dim must be 1 or B"
    mask_b = bias.shape[0]
    bias = jnp.broadcast_to(bias[:, 0], (mask_b, S, S))

    in_bytes = jnp.dtype(query.dtype).itemsize
    w_bytes = mm_dtype.itemsize
    out_bytes = jnp.dtype(out_dtype).itemsize

    vmem_budget = 40 * 1024 * 1024      # headroom under v7x's 64 MiB physical VMEM

    def _fits(bb):
        return _vmem_bytes_estimate(bb, S, D, d_k, in_bytes, w_bytes, out_bytes,
                                    bb if mask_b == B else 1) <= vmem_budget

    bb = _pick_batch_block(B, S, _fits) if batch_block is None else batch_block
    assert B % bb == 0
    grid = (B // bb, num_heads)

    est = _vmem_bytes_estimate(bb, S, D, d_k, in_bytes, w_bytes, out_bytes,
                               bb if mask_b == B else 1)
    vmem_limit = int(min(56 * 1024 * 1024, max(32 * 1024 * 1024, int(1.5 * est))))

    seq_spec = pl.BlockSpec((bb, S, D), lambda b, h: (b, 0, 0))
    if mask_b == B:
        bias_spec = pl.BlockSpec((bb, S, S), lambda b, h: (b, 0, 0))
    else:
        bias_spec = pl.BlockSpec((1, S, S), lambda b, h: (0, 0, 0))
    wqkv_spec = pl.BlockSpec((None, D, d_k), lambda b, h: (h, 0, 0))
    wo_spec = pl.BlockSpec((None, d_k, D), lambda b, h: (h, 0, 0))

    kernel = functools.partial(
        _mha_head_kernel,
        scale=1.0 / math.sqrt(d_k),
        approx_recip=(mm_dtype == jnp.dtype(jnp.bfloat16)))

    cost = pl.CostEstimate(
        flops=8 * B * S * D * D + 4 * B * num_heads * S * S * d_k,
        transcendentals=B * num_heads * S * S,
        bytes_accessed=(3 * B * S * D * in_bytes
                        + 4 * D * D * w_bytes
                        + mask_b * S * S * 2
                        + B * S * D * out_bytes),
    )

    return pl.pallas_call(
        kernel,
        out_shape=jax.ShapeDtypeStruct((B, S, D), out_dtype),
        grid_spec=pltpu.PrefetchScalarGridSpec(
            num_scalar_prefetch=0,
            grid=grid,
            in_specs=[seq_spec, seq_spec, seq_spec, bias_spec,
                      wqkv_spec, wqkv_spec, wqkv_spec, wo_spec],
            out_specs=seq_spec,
            scratch_shapes=[pltpu.VMEM((bb, S, D), jnp.float32)],
        ),
        compiler_params=pltpu.CompilerParams(
            dimension_semantics=("parallel", "arbitrary"),
            vmem_limit_bytes=vmem_limit),
        cost_estimate=cost,
    )(query, key, values, bias, wq_h, wk_h, wv_h, wo_h)


def _reference(query, key, values, mask, wq, wk, wv, wo, num_heads):
    """Plain-JAX reference mirroring the PyTorch forward (eval mode)."""
    B, S, D = query.shape
    d_k = D // num_heads
    q = query @ wq.T
    k = key @ wk.T
    v = values @ wv.T
    q = q.reshape(B, S, num_heads, d_k).transpose(0, 2, 1, 3)
    k = k.reshape(B, S, num_heads, d_k).transpose(0, 2, 1, 3)
    v = v.reshape(B, S, num_heads, d_k).transpose(0, 2, 1, 3)
    scores = jnp.einsum("bhqd,bhkd->bhqk", q, k) / math.sqrt(d_k)
    scores = jnp.where(mask == 0, -1e9, scores)
    attn = jax.nn.softmax(scores, axis=-1)
    out = jnp.einsum("bhqk,bhkd->bhqd", attn, v)
    out = out.transpose(0, 2, 1, 3).reshape(B, S, D)
    return out @ wo.T


if __name__ == "__main__":
    B, S, D, H = 2, 8, 32, 4       # batch, seq, dim_model, num_heads
    # NOTE: these are correctness-test shapes; for benchmarking use D a multiple
    # of 128 and S a multiple of 8/16 so stores are lane/sublane-dense.

    key0 = jax.random.PRNGKey(0)
    kq, kk, kv, kwq, kwk, kwv, kwo = jax.random.split(key0, 7)

    query = jax.random.normal(kq, (B, S, D), dtype=jnp.float32)
    keyt = jax.random.normal(kk, (B, S, D), dtype=jnp.float32)
    values = jax.random.normal(kv, (B, S, D), dtype=jnp.float32)

    bound = 1.0 / math.sqrt(D)
    wq = jax.random.uniform(kwq, (D, D), jnp.float32, -bound, bound)
    wk = jax.random.uniform(kwk, (D, D), jnp.float32, -bound, bound)
    wv = jax.random.uniform(kwv, (D, D), jnp.float32, -bound, bound)
    wo = jax.random.uniform(kwo, (D, D), jnp.float32, -bound, bound)

    # Causal mask (1 = keep, 0 = masked), broadcast over batch and heads.
    mask = jnp.tril(jnp.ones((S, S), jnp.float32))[None, None, :, :]

    ref = _reference(query, keyt, values, mask, wq, wk, wv, wo, H)

    # f32 MXU path (default): tight check vs. the plain-JAX reference.
    out = multi_head_attention(query, keyt, values, mask, wq, wk, wv, wo, H)
    out = jax.block_until_ready(out)
    assert out.shape == (B, S, D)
    assert jnp.allclose(out, ref, atol=5e-3, rtol=5e-3), "f32 mismatch vs reference"

    # bf16 MXU path (v5e/v6e/v7x throughput option): looser tolerance.
    out_bf16 = multi_head_attention(query, keyt, values, mask, wq, wk, wv, wo, H,
                                    matmul_dtype=jnp.bfloat16)
    out_bf16 = jax.block_until_ready(out_bf16)
    assert out_bf16.shape == (B, S, D)
    assert jnp.allclose(out_bf16, ref, atol=5e-2, rtol=5e-2), "bf16 mismatch vs reference"

    print("KERNEL_OK")
</pallas_src>

<mosaic_0001>
module attributes {stable_mosaic.version = 11 : i64} {
  func.func @_mha_head_kernel(%arg0: i32, %arg1: i32, %arg2: memref<1x8x32xf32, #tpu.memory_space<vmem>>, %arg3: memref<1x8x32xf32, #tpu.memory_space<vmem>>, %arg4: memref<1x8x32xf32, #tpu.memory_space<vmem>>, %arg5: memref<1x8x8xbf16, #tpu.memory_space<vmem>>, %arg6: memref<1x32x8xf32, #tpu.memory_space<vmem>>, %arg7: memref<1x32x8xf32, #tpu.memory_space<vmem>>, %arg8: memref<1x32x8xf32, #tpu.memory_space<vmem>>, %arg9: memref<1x8x32xf32, #tpu.memory_space<vmem>>, %arg10: memref<1x8x32xf32, #tpu.memory_space<vmem>>, %arg11: memref<1x8x32xf32, #tpu.memory_space<vmem>>) attributes {dimension_semantics = [#tpu.dimension_semantics<parallel>, #tpu.dimension_semantics<arbitrary>], iteration_bounds = array<i64: 2, 4>, scalar_prefetch = 0 : i64, scratch_operands = 1 : i64, tpu.core_type = #tpu.core_type<tc>, window_params = [{transform_indices = @transform_0, window_bounds = array<i64: 1, 8, 32>}, {transform_indices = @transform_1, window_bounds = array<i64: 1, 8, 32>}, {transform_indices = @transform_2, window_bounds = array<i64: 1, 8, 32>}, {pipeline_mode = #tpu.pipeline_mode<synchronous>, transform_indices = @transform_3, window_bounds = array<i64: 1, 8, 8>}, {transform_indices = @transform_4, window_bounds = array<i64: 1, 32, 8>}, {transform_indices = @transform_5, window_bounds = array<i64: 1, 32, 8>}, {transform_indices = @transform_6, window_bounds = array<i64: 1, 32, 8>}, {transform_indices = @transform_7, window_bounds = array<i64: 1, 8, 32>}, {transform_indices = @transform_8, window_bounds = array<i64: 1, 8, 32>}]} {
    %c0_i32 = arith.constant 0 : i32
    %0 = arith.cmpi eq, %arg1, %c0_i32 : i32
    %1 = arith.extui %0 : i1 to i32
    %c0_i32_0 = arith.constant 0 : i32
    %2 = arith.cmpi ne, %1, %c0_i32_0 : i32
    scf.if %2 {
      %cst_39 = arith.constant 0.000000e+00 : f32
      %48 = vector.broadcast %cst_39 : f32 to vector<1x8x32xf32>
      %c0_40 = arith.constant 0 : index
      %c0_41 = arith.constant 0 : index
      %c0_42 = arith.constant 0 : index
      %49 = vector.load %arg11[%c0_40, %c0_41, %c0_42] : memref<1x8x32xf32, #tpu.memory_space<vmem>>, vector<1x8x32xf32>
      tpu.vector_store %arg11[%c0_40, %c0_41, %c0_42], %48 {strides = array<i32>} : memref<1x8x32xf32, #tpu.memory_space<vmem>>, vector<1x8x32xf32>,
    } else {
    }
    %c0 = arith.constant 0 : index
    %c0_1 = arith.constant 0 : index
    %c0_2 = arith.constant 0 : index
    %3 = vector.load %arg2[%c0, %c0_1, %c0_2] : memref<1x8x32xf32, #tpu.memory_space<vmem>>, vector<1x8x32xf32>
    %4 = vector.shape_cast %3 : vector<1x8x32xf32> to vector<8x32xf32>
    %c0_3 = arith.constant 0 : index
    %c0_4 = arith.constant 0 : index
    %c0_5 = arith.constant 0 : index
    %5 = vector.load %arg3[%c0_3, %c0_4, %c0_5] : memref<1x8x32xf32, #tpu.memory_space<vmem>>, vector<1x8x32xf32>
    %6 = vector.shape_cast %5 : vector<1x8x32xf32> to vector<8x32xf32>
    %c0_6 = arith.constant 0 : index
    %c0_7 = arith.constant 0 : index
    %c0_8 = arith.constant 0 : index
    %7 = vector.load %arg4[%c0_6, %c0_7, %c0_8] : memref<1x8x32xf32, #tpu.memory_space<vmem>>, vector<1x8x32xf32>
    %8 = vector.shape_cast %7 : vector<1x8x32xf32> to vector<8x32xf32>
    %c0_9 = arith.constant 0 : index
    %c0_10 = arith.constant 0 : index
    %c0_11 = arith.constant 0 : index
    %9 = vector.load %arg6[%c0_9, %c0_10, %c0_11] : memref<1x32x8xf32, #tpu.memory_space<vmem>>, vector<1x32x8xf32>
    %10 = vector.shape_cast %9 : vector<1x32x8xf32> to vector<32x8xf32>
    %cst = arith.constant dense<0.000000e+00> : vector<8x8xf32>
    %11 = tpu.matmul %4, %10, %cst {dimension_numbers = #tpu.dot_dimension_numbers<[1], [0], [0], [1], [0, 0, 1, 1], [], []>} : vector<8x32xf32>, vector<32x8xf32>, vector<8x8xf32> -> vector<8x8xf32>
    %cst_12 = arith.constant 0.353553385 : f32
    %12 = vector.broadcast %cst_12 : f32 to vector<8x8xf32>
    %13 = arith.mulf %11, %12 : vector<8x8xf32>
    %c0_13 = arith.constant 0 : index
    %c0_14 = arith.constant 0 : index
    %c0_15 = arith.constant 0 : index
    %14 = vector.load %arg7[%c0_13, %c0_14, %c0_15] : memref<1x32x8xf32, #tpu.memory_space<vmem>>, vector<1x32x8xf32>
    %15 = vector.shape_cast %14 : vector<1x32x8xf32> to vector<32x8xf32>
    %cst_16 = arith.constant dense<0.000000e+00> : vector<8x8xf32>
    %16 = tpu.matmul %6, %15, %cst_16 {dimension_numbers = #tpu.dot_dimension_numbers<[1], [0], [0], [1], [0, 0, 1, 1], [], []>} : vector<8x32xf32>, vector<32x8xf32>, vector<8x8xf32> -> vector<8x8xf32>
    %c0_17 = arith.constant 0 : index
    %c0_18 = arith.constant 0 : index
    %c0_19 = arith.constant 0 : index
    %17 = vector.load %arg8[%c0_17, %c0_18, %c0_19] : memref<1x32x8xf32, #tpu.memory_space<vmem>>, vector<1x32x8xf32>
    %18 = vector.shape_cast %17 : vector<1x32x8xf32> to vector<32x8xf32>
    %cst_20 = arith.constant dense<0.000000e+00> : vector<8x8xf32>
    %19 = tpu.matmul %8, %18, %cst_20 {dimension_numbers = #tpu.dot_dimension_numbers<[1], [0], [0], [1], [0, 0, 1, 1], [], []>} : vector<8x32xf32>, vector<32x8xf32>, vector<8x8xf32> -> vector<8x8xf32>
    %20 = vector.shape_cast %13 : vector<8x8xf32> to vector<1x8x8xf32>
    %21 = vector.shape_cast %16 : vector<8x8xf32> to vector<1x8x8xf32>
    %22 = vector.shape_cast %19 : vector<8x8xf32> to vector<1x8x8xf32>
    "tpu.trace_start"() <{level = 10 : i32, message = "bqd,bkd->bqk"}> : () -> ()
    %cst_21 = arith.constant dense<0.000000e+00> : vector<1x8x8xf32>
    %23 = tpu.matmul %20, %21, %cst_21 {dimension_numbers = #tpu.dot_dimension_numbers<[2], [2], [1], [1], [0, 0, 0, 1, 1, 1], [0], [0]>} : vector<1x8x8xf32>, vector<1x8x8xf32>, vector<1x8x8xf32> -> vector<1x8x8xf32>
    "tpu.trace_stop"() : () -> ()
    %c0_22 = arith.constant 0 : index
    %c0_23 = arith.constant 0 : index
    %c0_24 = arith.constant 0 : index
    %24 = vector.load %arg5[%c0_22, %c0_23, %c0_24] : memref<1x8x8xbf16, #tpu.memory_space<vmem>>, vector<1x8x8xbf16>
    %25 = arith.extf %24 : vector<1x8x8xbf16> to vector<1x8x8xf32>
    %26 = arith.addf %23, %25 : vector<1x8x8xf32>
    %cst_25 = arith.constant dense<0xFF800000> : vector<1x8xf32>
    %27 = vector.multi_reduction <maximumf>, %26, %cst_25 [2] : vector<1x8x8xf32> to vector<1x8xf32>
    %28 = vector.shape_cast %27 : vector<1x8xf32> to vector<1x8x1xf32>
    %29 = vector.broadcast %28 : vector<1x8x1xf32> to vector<1x8x8xf32>
    %30 = arith.subf %26, %29 : vector<1x8x8xf32>
    %31 = math.exp %30 : vector<1x8x8xf32>
    %cst_26 = arith.constant dense<0.000000e+00> : vector<1x8xf32>
    %32 = vector.multi_reduction <add>, %31, %cst_26 [2] : vector<1x8x8xf32> to vector<1x8xf32>
    %33 = vector.shape_cast %32 : vector<1x8xf32> to vector<1x8x1xf32>
    %34 = vector.broadcast %33 : vector<1x8x1xf32> to vector<1x8x8xf32>
    %35 = arith.divf %31, %34 : vector<1x8x8xf32>
    "tpu.trace_start"() <{level = 10 : i32, message = "bqk,bkd->bqd"}> : () -> ()
    %cst_27 = arith.constant dense<0.000000e+00> : vector<1x8x8xf32>
    %36 = tpu.matmul %35, %22, %cst_27 {dimension_numbers = #tpu.dot_dimension_numbers<[2], [1], [1], [2], [0, 0, 0, 1, 1, 2], [0], [0]>} : vector<1x8x8xf32>, vector<1x8x8xf32>, vector<1x8x8xf32> -> vector<1x8x8xf32>
    "tpu.trace_stop"() : () -> ()
    %c0_28 = arith.constant 0 : index
    %c0_29 = arith.constant 0 : index
    %c0_30 = arith.constant 0 : index
    %37 = vector.load %arg11[%c0_28, %c0_29, %c0_30] : memref<1x8x32xf32, #tpu.memory_space<vmem>>, vector<1x8x32xf32>
    %38 = vector.shape_cast %36 : vector<1x8x8xf32> to vector<8x8xf32>
    %c0_31 = arith.constant 0 : index
    %c0_32 = arith.constant 0 : index
    %c0_33 = arith.constant 0 : index
    %39 = vector.load %arg9[%c0_31, %c0_32, %c0_33] : memref<1x8x32xf32, #tpu.memory_space<vmem>>, vector<1x8x32xf32>
    %40 = vector.shape_cast %39 : vector<1x8x32xf32> to vector<8x32xf32>
    %cst_34 = arith.constant dense<0.000000e+00> : vector<8x32xf32>
    %41 = tpu.matmul %38, %40, %cst_34 {dimension_numbers = #tpu.dot_dimension_numbers<[1], [0], [0], [1], [0, 0, 1, 1], [], []>} : vector<8x8xf32>, vector<8x32xf32>, vector<8x32xf32> -> vector<8x32xf32>
    %42 = vector.shape_cast %41 : vector<8x32xf32> to vector<1x8x32xf32>
    %43 = arith.addf %37, %42 : vector<1x8x32xf32>
    %c0_35 = arith.constant 0 : index
    %c0_36 = arith.constant 0 : index
    %c0_37 = arith.constant 0 : index
    %44 = vector.load %arg11[%c0_35, %c0_36, %c0_37] : memref<1x8x32xf32, #tpu.memory_space<vmem>>, vector<1x8x32xf32>
    tpu.vector_store %arg11[%c0_35, %c0_36, %c0_37], %43 {strides = array<i32>} : memref<1x8x32xf32, #tpu.memory_space<vmem>>, vector<1x8x32xf32>,
    %c3_i32 = arith.constant 3 : i32
    %45 = arith.cmpi eq, %arg1, %c3_i32 : i32
    %46 = arith.extui %45 : i1 to i32
    %c0_i32_38 = arith.constant 0 : i32
    %47 = arith.cmpi ne, %46, %c0_i32_38 : i32
    scf.if %47 {
      %c0_39 = arith.constant 0 : index
      %c0_40 = arith.constant 0 : index
      %c0_41 = arith.constant 0 : index
      %48 = vector.load %arg11[%c0_39, %c0_40, %c0_41] : memref<1x8x32xf32, #tpu.memory_space<vmem>>, vector<1x8x32xf32>
      %c0_42 = arith.constant 0 : index
      %c0_43 = arith.constant 0 : index
      %c0_44 = arith.constant 0 : index
      %49 = vector.load %arg10[%c0_42, %c0_43, %c0_44] : memref<1x8x32xf32, #tpu.memory_space<vmem>>, vector<1x8x32xf32>
      tpu.vector_store %arg10[%c0_42, %c0_43, %c0_44], %48 {strides = array<i32>} : memref<1x8x32xf32, #tpu.memory_space<vmem>>, vector<1x8x32xf32>,
    } else {
    }
    return
  }
  func.func @transform_0(%arg0: i32, %arg1: i32) -> (i32, i32, i32) {
    %c0_i32 = arith.constant 0 : i32
    %c0_i32_0 = arith.constant 0 : i32
    %c0_i32_1 = arith.constant 0 : i32
    return %arg0, %c0_i32, %c0_i32_0 : i32, i32, i32
  }
  func.func @transform_1(%arg0: i32, %arg1: i32) -> (i32, i32, i32) {
    %c0_i32 = arith.constant 0 : i32
    %c0_i32_0 = arith.constant 0 : i32
    %c0_i32_1 = arith.constant 0 : i32
    return %arg0, %c0_i32, %c0_i32_0 : i32, i32, i32
  }
  func.func @transform_2(%arg0: i32, %arg1: i32) -> (i32, i32, i32) {
    %c0_i32 = arith.constant 0 : i32
    %c0_i32_0 = arith.constant 0 : i32
    %c0_i32_1 = arith.constant 0 : i32
    return %arg0, %c0_i32, %c0_i32_0 : i32, i32, i32
  }
  func.func @transform_3(%arg0: i32, %arg1: i32) -> (i32, i32, i32) {
    %c0_i32 = arith.constant 0 : i32
    %c0_i32_0 = arith.constant 0 : i32
    %c0_i32_1 = arith.constant 0 : i32
    %c0_i32_2 = arith.constant 0 : i32
    return %c0_i32, %c0_i32_0, %c0_i32_1 : i32, i32, i32
  }
  func.func @transform_4(%arg0: i32, %arg1: i32) -> (i32, i32, i32) {
    %c0_i32 = arith.constant 0 : i32
    %c0_i32_0 = arith.constant 0 : i32
    %c0_i32_1 = arith.constant 0 : i32
    return %arg1, %c0_i32, %c0_i32_0 : i32, i32, i32
  }
  func.func @transform_5(%arg0: i32, %arg1: i32) -> (i32, i32, i32) {
    %c0_i32 = arith.constant 0 : i32
    %c0_i32_0 = arith.constant 0 : i32
    %c0_i32_1 = arith.constant 0 : i32
    return %arg1, %c0_i32, %c0_i32_0 : i32, i32, i32
  }
  func.func @transform_6(%arg0: i32, %arg1: i32) -> (i32, i32, i32) {
    %c0_i32 = arith.constant 0 : i32
    %c0_i32_0 = arith.constant 0 : i32
    %c0_i32_1 = arith.constant 0 : i32
    return %arg1, %c0_i32, %c0_i32_0 : i32, i32, i32
  }
  func.func @transform_7(%arg0: i32, %arg1: i32) -> (i32, i32, i32) {
    %c0_i32 = arith.constant 0 : i32
    %c0_i32_0 = arith.constant 0 : i32
    %c0_i32_1 = arith.constant 0 : i32
    return %arg1, %c0_i32, %c0_i32_0 : i32, i32, i32
  }
  func.func @transform_8(%arg0: i32, %arg1: i32) -> (i32, i32, i32) {
    %c0_i32 = arith.constant 0 : i32
    %c0_i32_0 = arith.constant 0 : i32
    %c0_i32_1 = arith.constant 0 : i32
    return %arg0, %c0_i32, %c0_i32_0 : i32, i32, i32
  }
}

</mosaic_0001>

<llo_original>
// kernel: tpu_custom_call.1
$region0: #{tpu_custom_call.1}
  #allocation0 [shape = 'u32[]', space=smem, size = 0x4, offset = 0x4, fixed_abs, tag = 'smem constant byte address 0x4 - core index']
  #allocation1 [shape = 'u32[72,128]{1,0:T(1,128)}', space=vmem, size = 0x9000, scoped, tag = 'internal scratch']
  #allocation2 [shape = 'f32[1,8,32]{2,1,0:T(8,128)}', space=vmem, size = 0x1000, scoped, tag = 'scratch operand']
  %s0 = inlined_call_operand.vmem [shape: f32[2,8,32], index: 0, kind: input, shape index: {}]
  %s1 = inlined_call_operand.vmem [shape: f32[2,8,32], index: 1, kind: input, shape index: {}]
  %s2 = inlined_call_operand.vmem [shape: f32[2,8,32], index: 2, kind: input, shape index: {}]
  %s3 = inlined_call_operand.vmem [shape: bf16[1,8,8], index: 3, kind: input, shape index: {}]
  %s4 = inlined_call_operand.vmem [shape: f32[4,32,8], index: 4, kind: input, shape index: {}]
  %s5 = inlined_call_operand.vmem [shape: f32[4,32,8], index: 5, kind: input, shape index: {}]
  %s6 = inlined_call_operand.vmem [shape: f32[4,32,8], index: 6, kind: input, shape index: {}]
  %s7 = inlined_call_operand.vmem [shape: f32[4,8,32], index: 7, kind: input, shape index: {}]
  %s8 = inlined_call_operand.hbm [shape: f32[2,8,32], index: 8, kind: output, shape index: {}]
  %s9 = sld [smem:[#allocation0]]
  $region73: #{tpu_custom_call.1} parent=0
    _
  %s11 = ssub.s32 1, %s9
  %s12 = scalar_select 0, %s11, %s9
  $region1: #{tpu_custom_call.1} parent=0
    #allocation3 [shape = 'u8[8192]{0}', space=vmem, size = 0x2000, scoped, tag = 'output window, operand 0']
    #allocation4 [shape = 's32[2]{0}', space=sflag, size = 0x8, scoped, tag = 'scoped memory for tpu_custom_call.1']
    %13 = vsyncpa [#allocation4], 0
    %s14 = scalar_lea.sflag [#allocation4], 1
    %15 = vsyncpa %s14, 0
    loop: start=0, step=1, limit=10
    $region2: #{tpu_custom_call.1} parent=1 // loop_pre_header
      _
    $region3: #{tpu_custom_call.1} parent=1 // loop_header
      %s17 = sphi 0, %s21
      %p18 = scmp.ge.s32.totalorder %s17, 10
      %s24 = sphi 0, %s36
      %s25 = sphi 0, %s32
      %s26 = sphi 0, %s24
      %s27 = sphi 0, %s25
      %s28 = sphi 0, %s26
      %s29 = sphi 0, %s27
      %s39 = sphi 0, %s41
      %s42 = sphi 0, %s39
      %s43 = sphi 0, %s42
      %s59 = sphi 0, %s43
      %s65 = sphi 0, %s67
      %s68 = sphi 0, %s65
      %s69 = sphi 0, %s68
      %s85 = sphi 0, %s69
      %s91 = sphi 0, %s93
      %s94 = sphi 0, %s91
      %s95 = sphi 0, %s94
      %s111 = sphi 0, %s95
      %s115 = sphi 0, %s115
      %s117 = sphi 0, %s115
      %s118 = sphi 0, %s117
      %s132 = sphi 0, %s118
      %s138 = sphi 0, %s140
      %s141 = sphi 0, %s138
      %s142 = sphi 0, %s141
      %s158 = sphi 0, %s142
      %s164 = sphi 0, %s166
      %s167 = sphi 0, %s164
      %s168 = sphi 0, %s167
      %s184 = sphi 0, %s168
      %s190 = sphi 0, %s192
      %s193 = sphi 0, %s190
      %s194 = sphi 0, %s193
      %s210 = sphi 0, %s194
      %s216 = sphi 0, %s218
      %s219 = sphi 0, %s216
      %s220 = sphi 0, %s219
      %s236 = sphi 0, %s220
      %s242 = sphi 0, %s244
      %s245 = sphi 0, %s242
      %s246 = sphi 0, %s245
      %s262 = sphi 0, %s246
    $region4: #{tpu_custom_call.1} parent=1 // loop_header_branch
      %20 = sbr.rel (%p18) target = $region8
    $region5: #{tpu_custom_call.1} parent=1 // loop_body
      %s22 = ssub.s32 %s17, 1
      %s23 = ssub.s32 %s17, 2
      %s30 = sadd.s32 1, %s25
      %p31 = scmp.ge.s32.totalorder %s30, 4
      %s32 = scalar_select %p31, 0, %s30
      %s33 = sadd.s32 1, %s24
      %s34 = scalar_select %p31, %s33, %s24
      %p35 = scmp.ge.s32.totalorder %s34, 2
      %s36 = scalar_select %p35, 0, %s34
      %s37 = ssub.s32 %s24, %s36
      %p38 = scmp.eq.s32.totalorder %s37, 0
      %s40 = sadd.s32 %s39, 1
      %s41 = scalar_select %p38, %s39, %s40
      %p44 = pneg %p38
      %p45 = scmp.eq.s32.totalorder %s17, 7
      %p46 = por %p44, %p45
      %p47 = scmp.ne.s32.totalorder %s39, %s42
      %p48 = scmp.eq.s32.totalorder %s17, 0
      %p49 = por %p47, %p48
      %p50 = scmp.ne.s32.totalorder %s39, %s42
      %p51 = scmp.eq.s32.totalorder %s22, 7
      %p52 = por %p50, %p51
      %p53 = scmp.ne.s32.totalorder %s42, %s43
      %p54 = scmp.eq.s32.totalorder %s22, 0
      %p55 = por %p53, %p54
      %p56 = scmp.ne.s32.totalorder %s42, %s43
      %p57 = scmp.eq.s32.totalorder %s23, 7
      %p58 = por %p56, %p57
      %p60 = scmp.ne.s32.totalorder %s43, %s59
      %p61 = scmp.eq.s32.totalorder %s23, 0
      %p62 = por %p60, %p61
      %s63 = ssub.s32 %s24, %s36
      %p64 = scmp.eq.s32.totalorder %s63, 0
      %s66 = sadd.s32 %s65, 1
      %s67 = scalar_select %p64, %s65, %s66
      %p70 = pneg %p64
      %p71 = scmp.eq.s32.totalorder %s17, 7
      %p72 = por %p70, %p71
      %p73 = scmp.ne.s32.totalorder %s65, %s68
      %p74 = scmp.eq.s32.totalorder %s17, 0
      %p75 = por %p73, %p74
      %p76 = scmp.ne.s32.totalorder %s65, %s68
      %p77 = scmp.eq.s32.totalorder %s22, 7
      %p78 = por %p76, %p77
      %p79 = scmp.ne.s32.totalorder %s68, %s69
      %p80 = scmp.eq.s32.totalorder %s22, 0
      %p81 = por %p79, %p80
      %p82 = scmp.ne.s32.totalorder %s68, %s69
      %p83 = scmp.eq.s32.totalorder %s23, 7
      %p84 = por %p82, %p83
      %p86 = scmp.ne.s32.totalorder %s69, %s85
      %p87 = scmp.eq.s32.totalorder %s23, 0
      %p88 = por %p86, %p87
      %s89 = ssub.s32 %s24, %s36
      %p90 = scmp.eq.s32.totalorder %s89, 0
      %s92 = sadd.s32 %s91, 1
      %s93 = scalar_select %p90, %s91, %s92
      %p96 = pneg %p90
      %p97 = scmp.eq.s32.totalorder %s17, 7
      %p98 = por %p96, %p97
      %p99 = scmp.ne.s32.totalorder %s91, %s94
      %p100 = scmp.eq.s32.totalorder %s17, 0
      %p101 = por %p99, %p100
      %p102 = scmp.ne.s32.totalorder %s91, %s94
      %p103 = scmp.eq.s32.totalorder %s22, 7
      %p104 = por %p102, %p103
      %p105 = scmp.ne.s32.totalorder %s94, %s95
      %p106 = scmp.eq.s32.totalorder %s22, 0
      %p107 = por %p105, %p106
      %p108 = scmp.ne.s32.totalorder %s94, %s95
      %p109 = scmp.eq.s32.totalorder %s23, 7
      %p110 = por %p108, %p109
      %p112 = scmp.ne.s32.totalorder %s95, %s111
      %p113 = scmp.eq.s32.totalorder %s23, 0
      %p114 = por %p112, %p113
      %s116 = sadd.s32 %s115, 1
      %p119 = scmp.eq.s32.totalorder %s17, 7
      %p120 = scmp.ne.s32.totalorder %s115, %s117
      %p121 = scmp.eq.s32.totalorder %s17, 0
      %p122 = por %p120, %p121
      %p123 = scmp.ne.s32.totalorder %s115, %s117
      %p124 = scmp.eq.s32.totalorder %s22, 7
      %p125 = por %p123, %p124
      %p126 = scmp.ne.s32.totalorder %s117, %s118
      %p127 = scmp.eq.s32.totalorder %s22, 0
      %p128 = por %p126, %p127
      %p129 = scmp.ne.s32.totalorder %s117, %s118
      %p130 = scmp.eq.s32.totalorder %s23, 7
      %p131 = por %p129, %p130
      %p133 = scmp.ne.s32.totalorder %s118, %s132
      %p134 = scmp.eq.s32.totalorder %s23, 0
      %p135 = por %p133, %p134
      %s136 = ssub.s32 %s25, %s32
      %p137 = scmp.eq.s32.totalorder %s136, 0
      %s139 = sadd.s32 %s138, 1
      %s140 = scalar_select %p137, %s138, %s139
      %p143 = pneg %p137
      %p144 = scmp.eq.s32.totalorder %s17, 7
      %p145 = por %p143, %p144
      %p146 = scmp.ne.s32.totalorder %s138, %s141
      %p147 = scmp.eq.s32.totalorder %s17, 0
      %p148 = por %p146, %p147
      %p149 = scmp.ne.s32.totalorder %s138, %s141
      %p150 = scmp.eq.s32.totalorder %s22, 7
      %p151 = por %p149, %p150
      %p152 = scmp.ne.s32.totalorder %s141, %s142
      %p153 = scmp.eq.s32.totalorder %s22, 0
      %p154 = por %p152, %p153
      %p155 = scmp.ne.s32.totalorder %s141, %s142
      %p156 = scmp.eq.s32.totalorder %s23, 7
      %p157 = por %p155, %p156
      %p159 = scmp.ne.s32.totalorder %s142, %s158
      %p160 = scmp.eq.s32.totalorder %s23, 0
      %p161 = por %p159, %p160
      %s162 = ssub.s32 %s25, %s32
      %p163 = scmp.eq.s32.totalorder %s162, 0
      %s165 = sadd.s32 %s164, 1
      %s166 = scalar_select %p163, %s164, %s165
      %p169 = pneg %p163
      %p170 = scmp.eq.s32.totalorder %s17, 7
      %p171 = por %p169, %p170
      %p172 = scmp.ne.s32.totalorder %s164, %s167
      %p173 = scmp.eq.s32.totalorder %s17, 0
      %p174 = por %p172, %p173
      %p175 = scmp.ne.s32.totalorder %s164, %s167
      %p176 = scmp.eq.s32.totalorder %s22, 7
      %p177 = por %p175, %p176
      %p178 = scmp.ne.s32.totalorder %s167, %s168
      %p179 = scmp.eq.s32.totalorder %s22, 0
      %p180 = por %p178, %p179
      %p181 = scmp.ne.s32.totalorder %s167, %s168
      %p182 = scmp.eq.s32.totalorder %s23, 7
      %p183 = por %p181, %p182
      %p185 = scmp.ne.s32.totalorder %s168, %s184
      %p186 = scmp.eq.s32.totalorder %s23, 0
      %p187 = por %p185, %p186
      %s188 = ssub.s32 %s25, %s32
      %p189 = scmp.eq.s32.totalorder %s188, 0
      %s191 = sadd.s32 %s190, 1
      %s192 = scalar_select %p189, %s190, %s191
      %p195 = pneg %p189
      %p196 = scmp.eq.s32.totalorder %s17, 7
      %p197 = por %p195, %p196
      %p198 = scmp.ne.s32.totalorder %s190, %s193
      %p199 = scmp.eq.s32.totalorder %s17, 0
      %p200 = por %p198, %p199
      %p201 = scmp.ne.s32.totalorder %s190, %s193
      %p202 = scmp.eq.s32.totalorder %s22, 7
      %p203 = por %p201, %p202
      %p204 = scmp.ne.s32.totalorder %s193, %s194
      %p205 = scmp.eq.s32.totalorder %s22, 0
      %p206 = por %p204, %p205
      %p207 = scmp.ne.s32.totalorder %s193, %s194
      %p208 = scmp.eq.s32.totalorder %s23, 7
      %p209 = por %p207, %p208
      %p211 = scmp.ne.s32.totalorder %s194, %s210
      %p212 = scmp.eq.s32.totalorder %s23, 0
      %p213 = por %p211, %p212
      %s214 = ssub.s32 %s25, %s32
      %p215 = scmp.eq.s32.totalorder %s214, 0
      %s217 = sadd.s32 %s216, 1
      %s218 = scalar_select %p215, %s216, %s217
      %p221 = pneg %p215
      %p222 = scmp.eq.s32.totalorder %s17, 7
      %p223 = por %p221, %p222
      %p224 = scmp.ne.s32.totalorder %s216, %s219
      %p225 = scmp.eq.s32.totalorder %s17, 0
      %p226 = por %p224, %p225
      %p227 = scmp.ne.s32.totalorder %s216, %s219
      %p228 = scmp.eq.s32.totalorder %s22, 7
      %p229 = por %p227, %p228
      %p230 = scmp.ne.s32.totalorder %s219, %s220
      %p231 = scmp.eq.s32.totalorder %s22, 0
      %p232 = por %p230, %p231
      %p233 = scmp.ne.s32.totalorder %s219, %s220
      %p234 = scmp.eq.s32.totalorder %s23, 7
      %p235 = por %p233, %p234
      %p237 = scmp.ne.s32.totalorder %s220, %s236
      %p238 = scmp.eq.s32.totalorder %s23, 0
      %p239 = por %p237, %p238
      %s240 = ssub.s32 %s24, %s36
      %p241 = scmp.eq.s32.totalorder %s240, 0
      %s243 = sadd.s32 %s242, 1
      %s244 = scalar_select %p241, %s242, %s243
      %p247 = pneg %p241
      %p248 = scmp.eq.s32.totalorder %s17, 7
      %p249 = por %p247, %p248
      %p250 = scmp.ne.s32.totalorder %s242, %s245
      %p251 = scmp.eq.s32.totalorder %s17, 0
      %p252 = por %p250, %p251
      %p253 = scmp.ne.s32.totalorder %s242, %s245
      %p254 = scmp.eq.s32.totalorder %s22, 7
      %p255 = por %p253, %p254
      %p256 = scmp.ne.s32.totalorder %s245, %s246
      %p257 = scmp.eq.s32.totalorder %s22, 0
      %p258 = por %p256, %p257
      %p259 = scmp.ne.s32.totalorder %s245, %s246
      %p260 = scmp.eq.s32.totalorder %s23, 7
      %p261 = por %p259, %p260
      %p263 = scmp.ne.s32.totalorder %s246, %s262
      %p264 = scmp.eq.s32.totalorder %s23, 0
      %p265 = por %p263, %p264
      %p266 = scmp.le.s32.totalorder 1, %s17
      %p267 = scmp.lt.s32.totalorder %s17, 9
      %p268 = pnand %p266, %p267
      %p269 = pneg %p268
      // Predicated region
      $region9: #{tpu_custom_call.1} parent=5 // pred_check
        _
      $region10: #{tpu_custom_call.1} parent=5 // pred_check_branch
        %271 = sbr.rel (%p268) target = $region12
      $region11: #{tpu_custom_call.1} parent=5 // pred_region
        %s272 = ssub.s32 %s17, 1
        // Predicated region
        $region13: #{tpu_custom_call.1} parent=11 // pred_check
          %p273 = pneg %p128
        $region14: #{tpu_custom_call.1} parent=11 // pred_check_branch
          %275 = sbr.rel (%p273) target = $region16
        $region15: #{tpu_custom_call.1} parent=11 // pred_region
          _
        $region16: #{tpu_custom_call.1} parent=11 // pred_fallthru
          _
      $region12: #{tpu_custom_call.1} parent=5 // pred_fallthru
        _
      %p276 = scmp.lt.s32.totalorder %s17, 8
      // Predicated region
      $region17: #{tpu_custom_call.1} parent=5 // pred_check
        %p277 = pneg %p276
      $region18: #{tpu_custom_call.1} parent=5 // pred_check_branch
        %279 = sbr.rel (%p277) target = $region20
      $region19: #{tpu_custom_call.1} parent=5 // pred_region
        // Predicated region
        $region21: #{tpu_custom_call.1} parent=19 // pred_check
          %p280 = pneg %p49
        $region22: #{tpu_custom_call.1} parent=19 // pred_check_branch
          %282 = sbr.rel (%p280) target = $region24
        $region23: #{tpu_custom_call.1} parent=19 // pred_region
          %p283 = scmp.lt.s32.totalorder %s24, 1
          %s284 = scalar_select %p283, %s24, 1
          %s285 = smul.addr %s284, 8
          %s286 = scalar_lea.vmem %s0, %s285
        $region24: #{tpu_custom_call.1} parent=19 // pred_fallthru
          _
        // Predicated region
        $region25: #{tpu_custom_call.1} parent=19 // pred_check
          %p287 = pneg %p75
        $region26: #{tpu_custom_call.1} parent=19 // pred_check_branch
          %289 = sbr.rel (%p287) target = $region28
        $region27: #{tpu_custom_call.1} parent=19 // pred_region
          %p290 = scmp.lt.s32.totalorder %s24, 1
          %s291 = scalar_select %p290, %s24, 1
          %s292 = smul.addr %s291, 8
          %s293 = scalar_lea.vmem %s1, %s292
        $region28: #{tpu_custom_call.1} parent=19 // pred_fallthru
          _
        // Predicated region
        $region29: #{tpu_custom_call.1} parent=19 // pred_check
          %p294 = pneg %p101
        $region30: #{tpu_custom_call.1} parent=19 // pred_check_branch
          %296 = sbr.rel (%p294) target = $region32
        $region31: #{tpu_custom_call.1} parent=19 // pred_region
          %p297 = scmp.lt.s32.totalorder %s24, 1
          %s298 = scalar_select %p297, %s24, 1
          %s299 = smul.addr %s298, 8
          %s300 = scalar_lea.vmem %s2, %s299
        $region32: #{tpu_custom_call.1} parent=19 // pred_fallthru
          _
        // Predicated region
        $region33: #{tpu_custom_call.1} parent=19 // pred_check
          %p301 = pneg %p148
        $region34: #{tpu_custom_call.1} parent=19 // pred_check_branch
          %303 = sbr.rel (%p301) target = $region36
        $region35: #{tpu_custom_call.1} parent=19 // pred_region
          %p304 = scmp.lt.s32.totalorder %s25, 3
          %s305 = scalar_select %p304, %s25, 3
          %s306 = smul.addr %s305, 4
          %s307 = smul.addr %s306, 8
          %s308 = scalar_lea.vmem %s4, %s307
        $region36: #{tpu_custom_call.1} parent=19 // pred_fallthru
          _
        // Predicated region
        $region37: #{tpu_custom_call.1} parent=19 // pred_check
          %p309 = pneg %p174
        $region38: #{tpu_custom_call.1} parent=19 // pred_check_branch
          %311 = sbr.rel (%p309) target = $region40
        $region39: #{tpu_custom_call.1} parent=19 // pred_region
          %p312 = scmp.lt.s32.totalorder %s25, 3
          %s313 = scalar_select %p312, %s25, 3
          %s314 = smul.addr %s313, 4
          %s315 = smul.addr %s314, 8
          %s316 = scalar_lea.vmem %s5, %s315
        $region40: #{tpu_custom_call.1} parent=19 // pred_fallthru
          _
        // Predicated region
        $region41: #{tpu_custom_call.1} parent=19 // pred_check
          %p317 = pneg %p200
        $region42: #{tpu_custom_call.1} parent=19 // pred_check_branch
          %319 = sbr.rel (%p317) target = $region44
        $region43: #{tpu_custom_call.1} parent=19 // pred_region
          %p320 = scmp.lt.s32.totalorder %s25, 3
          %s321 = scalar_select %p320, %s25, 3
          %s322 = smul.addr %s321, 4
          %s323 = smul.addr %s322, 8
          %s324 = scalar_lea.vmem %s6, %s323
        $region44: #{tpu_custom_call.1} parent=19 // pred_fallthru
          _
        // Predicated region
        $region45: #{tpu_custom_call.1} parent=19 // pred_check
          %p325 = pneg %p226
        $region46: #{tpu_custom_call.1} parent=19 // pred_check_branch
          %327 = sbr.rel (%p325) target = $region48
        $region47: #{tpu_custom_call.1} parent=19 // pred_region
          %p328 = scmp.lt.s32.totalorder %s25, 3
          %s329 = scalar_select %p328, %s25, 3
          %s330 = smul.addr %s329, 8
          %s331 = scalar_lea.vmem %s7, %s330
        $region48: #{tpu_custom_call.1} parent=19 // pred_fallthru
          _
      $region20: #{tpu_custom_call.1} parent=5 // pred_fallthru
        _
      %p332 = scmp.le.s32.totalorder 1, %s17
      %p333 = scmp.lt.s32.totalorder %s17, 9
      %p334 = pnand %p332, %p333
      %p335 = pneg %p334
      // Predicated region
      $region49: #{tpu_custom_call.1} parent=5 // pred_check
        _
      $region50: #{tpu_custom_call.1} parent=5 // pred_check_branch
        %337 = sbr.rel (%p334) target = $region52
      $region51: #{tpu_custom_call.1} parent=5 // pred_region
        %s338 = ssub.s32 %s17, 1
        %p339 = scmp.lt.s32.totalorder %s26, 1
        %s340 = scalar_select %p339, %s26, 1
        %s341 = smul.addr %s340, 8
        %s342 = scalar_lea.vmem %s0, %s341
        %p343 = pneg %p55
        %p344 = pneg %p52
        %p345 = scmp.lt.s32.totalorder %s26, 1
        %s346 = scalar_select %p345, %s26, 1
        %s347 = smul.addr %s346, 8
        %s348 = scalar_lea.vmem %s1, %s347
        %p349 = pneg %p81
        %p350 = pneg %p78
        %p351 = scmp.lt.s32.totalorder %s26, 1
        %s352 = scalar_select %p351, %s26, 1
        %s353 = smul.addr %s352, 8
        %s354 = scalar_lea.vmem %s2, %s353
        %p355 = pneg %p107
        %p356 = pneg %p104
        %p357 = pneg %p128
        %p358 = pneg %p125
        %p359 = scmp.lt.s32.totalorder %s27, 3
        %s360 = scalar_select %p359, %s27, 3
        %s361 = smul.addr %s360, 4
        %s362 = smul.addr %s361, 8
        %s363 = scalar_lea.vmem %s4, %s362
        %p364 = pneg %p154
        %p365 = pneg %p151
        %p366 = scmp.lt.s32.totalorder %s27, 3
        %s367 = scalar_select %p366, %s27, 3
        %s368 = smul.addr %s367, 4
        %s369 = smul.addr %s368, 8
        %s370 = scalar_lea.vmem %s5, %s369
        %p371 = pneg %p180
        %p372 = pneg %p177
        %p373 = scmp.lt.s32.totalorder %s27, 3
        %s374 = scalar_select %p373, %s27, 3
        %s375 = smul.addr %s374, 4
        %s376 = smul.addr %s375, 8
        %s377 = scalar_lea.vmem %s6, %s376
        %p378 = pneg %p206
        %p379 = pneg %p203
        %p380 = scmp.lt.s32.totalorder %s27, 3
        %s381 = scalar_select %p380, %s27, 3
        %s382 = smul.addr %s381, 8
        %s383 = scalar_lea.vmem %s7, %s382
        %p384 = pneg %p232
        %p385 = pneg %p229
        %p386 = pneg %p258
        %p387 = pneg %p255
        %s388 = sand.u32 %s245, 1
        %s389 = scalar_lea.sflag [#allocation4], %s388
        %s390 = sand.u32 %s245, 1
        %s391 = smul.addr %s390, 8
        %s392 = scalar_lea.vmem [#allocation3], %s391
        %p393 = scmp.lt.s32.totalorder %s26, 1
        %s394 = scalar_select %p393, %s26, 1
        %s395 = smul.addr %s394, 8
        %s396 = scalar_lea.vmem %s0, %s395
        %p397 = scmp.lt.s32.totalorder %s26, 1
        %s398 = scalar_select %p397, %s26, 1
        %s399 = smul.addr %s398, 8
        %s400 = scalar_lea.vmem %s1, %s399
        %p401 = scmp.lt.s32.totalorder %s26, 1
        %s402 = scalar_select %p401, %s26, 1
        %s403 = smul.addr %s402, 8
        %s404 = scalar_lea.vmem %s2, %s403
        %p405 = scmp.lt.s32.totalorder %s27, 3
        %s406 = scalar_select %p405, %s27, 3
        %s407 = smul.addr %s406, 4
        %s408 = smul.addr %s407, 8
        %s409 = scalar_lea.vmem %s4, %s408
        %p410 = scmp.lt.s32.totalorder %s27, 3
        %s411 = scalar_select %p410, %s27, 3
        %s412 = smul.addr %s411, 4
        %s413 = smul.addr %s412, 8
        %s414 = scalar_lea.vmem %s5, %s413
        %p415 = scmp.lt.s32.totalorder %s27, 3
        %s416 = scalar_select %p415, %s27, 3
        %s417 = smul.addr %s416, 4
        %s418 = smul.addr %s417, 8
        %s419 = scalar_lea.vmem %s6, %s418
        %p420 = scmp.lt.s32.totalorder %s27, 3
        %s421 = scalar_select %p420, %s27, 3
        %s422 = smul.addr %s421, 8
        %s423 = scalar_lea.vmem %s7, %s422
        %p424 = scmp.eq.s32.totalorder %s27, 0
        // Predicated region
        $region53: #{tpu_custom_call.1} parent=51 // pred_check
          %p425 = pneg %p424
        $region54: #{tpu_custom_call.1} parent=51 // pred_check_branch
          %427 = sbr.rel (%p425) target = $region56
        $region55: #{tpu_custom_call.1} parent=51 // pred_region
          %vm428 = vcmask 261120
          %429 = vst.msk [vmem:[#allocation2] sm:$0xff] %vm428, 0.0
        $region56: #{tpu_custom_call.1} parent=51 // pred_fallthru
          _
        %v430 = vld [vmem:[%s396] sm:$0xff]
        %v431 = vld [vmem:[%s400] sm:$0xff]
        %v432 = vld [vmem:[%s404] sm:$0xff]
        %v433 = vld [vmem:[%s409] sm:$0xff]
        %v434 = vld [vmem:[%s409 + $0x8] sm:$0xff]
        %v435 = vld [vmem:[%s409 + $0x10] sm:$0xff]
        %v436 = vld [vmem:[%s409 + $0x18] sm:$0xff]
        %vm437 = vcmask 261120
        %v439 = vsel %vm437, %v430, 0
        %441 = vmatpush.msra.mxu0 0.0
        %442 = vmatpush.msra.mxu0 0.0
        %443 = vmatpush.msra.mxu0 0.0
        %444 = vmatpush.msra.mxu0 0.0
        %445 = vmatpush.msra.mxu0 0.0
        %446 = vmatpush.msra.mxu0 0.0
        %447 = vmatpush.msra.mxu0 0.0
        %448 = vmatpush.msra.mxu0 0.0
        %449 = vmatpush.msra.mxu0 0.0
        %450 = vmatpush.msra.mxu0 0.0
        %451 = vmatpush.msra.mxu0 0.0
        %452 = vmatpush.msra.mxu0 0.0
        %453 = vmatpush.msra.mxu0 %v436
        %454 = vmatpush.msra.mxu0 %v435
        %455 = vmatpush.msra.mxu0 %v434
        %456 = vmatpush.msra.mxu0 %v433
        %457 = vmatmul.f32.gmra.mxu0 %v439
        %v458 = vpop.f32.mrf.mxu0
        %v459 = vadd.f32 0.0, %v458
        %460 = vdwg.mxu0
        %v461 = vmul.f32 %v459, 0.35355338
        %v462 = vld [vmem:[%s414] sm:$0xff]
        %v463 = vld [vmem:[%s414 + $0x8] sm:$0xff]
        %v464 = vld [vmem:[%s414 + $0x10] sm:$0xff]
        %v465 = vld [vmem:[%s414 + $0x18] sm:$0xff]
        %v467 = vsel %vm437, %v431, 0
        %469 = vmatpush.msra.mxu0 0.0
        %470 = vmatpush.msra.mxu0 0.0
        %471 = vmatpush.msra.mxu0 0.0
        %472 = vmatpush.msra.mxu0 0.0
        %473 = vmatpush.msra.mxu0 0.0
        %474 = vmatpush.msra.mxu0 0.0
        %475 = vmatpush.msra.mxu0 0.0
        %476 = vmatpush.msra.mxu0 0.0
        %477 = vmatpush.msra.mxu0 0.0
        %478 = vmatpush.msra.mxu0 0.0
        %479 = vmatpush.msra.mxu0 0.0
        %480 = vmatpush.msra.mxu0 0.0
        %481 = vmatpush.msra.mxu0 %v465
        %482 = vmatpush.msra.mxu0 %v464
        %483 = vmatpush.msra.mxu0 %v463
        %484 = vmatpush.msra.mxu0 %v462
        %485 = vmatmul.f32.gmra.mxu0 %v467
        %v486 = vpop.f32.mrf.mxu0
        %v487 = vadd.f32 0.0, %v486
        %488 = vdwg.mxu0
        %v489 = vld [vmem:[%s419] sm:$0xff]
        %v490 = vld [vmem:[%s419 + $0x8] sm:$0xff]
        %v491 = vld [vmem:[%s419 + $0x10] sm:$0xff]
        %v492 = vld [vmem:[%s419 + $0x18] sm:$0xff]
        %v494 = vsel %vm437, %v432, 0
        %496 = vmatpush.msra.mxu0 0.0
        %497 = vmatpush.msra.mxu0 0.0
        %498 = vmatpush.msra.mxu0 0.0
        %499 = vmatpush.msra.mxu0 0.0
        %500 = vmatpush.msra.mxu0 0.0
        %501 = vmatpush.msra.mxu0 0.0
        %502 = vmatpush.msra.mxu0 0.0
        %503 = vmatpush.msra.mxu0 0.0
        %504 = vmatpush.msra.mxu0 0.0
        %505 = vmatpush.msra.mxu0 0.0
        %506 = vmatpush.msra.mxu0 0.0
        %507 = vmatpush.msra.mxu0 0.0
        %508 = vmatpush.msra.mxu0 %v492
        %509 = vmatpush.msra.mxu0 %v491
        %510 = vmatpush.msra.mxu0 %v490
        %511 = vmatpush.msra.mxu0 %v489
        %512 = vmatmul.f32.gmra.mxu0 %v494
        %v513 = vpop.f32.mrf.mxu0
        %v514 = vadd.f32 0.0, %v513
        %515 = vdwg.mxu0
        %v516 = vld [vmem:[%s3] sm:$0xf]
        %v517 = vunpack.c.l.bf16 %v516
        %vm518 = vcmask 64512
        %v520 = vsel %vm518, %v461, 0
        %v523 = vsel %vm518, %v487, 0
        %525 = vmatpush.xpose.msra.mxu0 0.0
        %526 = vmatpush.xpose.msra.mxu0 0.0
        %527 = vmatpush.xpose.msra.mxu0 0.0
        %528 = vmatpush.xpose.msra.mxu0 0.0
        %529 = vmatpush.xpose.msra.mxu0 0.0
        %530 = vmatpush.xpose.msra.mxu0 0.0
        %531 = vmatpush.xpose.msra.mxu0 0.0
        %532 = vmatpush.xpose.msra.mxu0 0.0
        %533 = vmatpush.xpose.msra.mxu0 0.0
        %534 = vmatpush.xpose.msra.mxu0 0.0
        %535 = vmatpush.xpose.msra.mxu0 0.0
        %536 = vmatpush.xpose.msra.mxu0 0.0
        %537 = vmatpush.xpose.msra.mxu0 0.0
        %538 = vmatpush.xpose.msra.mxu0 0.0
        %539 = vmatpush.xpose.msra.mxu0 0.0
        %540 = vmatpush.xpose.msra.mxu0 %v523
        %541 = vmatmul.f32.gmra.mxu0 %v520
        %v542 = vpop.f32.mrf.mxu0
        %v543 = vadd.f32 %v517, %v542
        %544 = vdwg.mxu0
        %v545 = vsel %vm518, %v543, -inf
        %546 = vmax.xlane.f32.xlu0 %v545
        %v547 = vpop.xlane.xlu0 %546
        %v548 = vsub.f32 %v543, %v547
        %v549 = vmul.f32 %v548, 1.442695
        %v550 = vpow.pop %v549
        %v551 = vsel %vm518, %v550, 0.0
        %552 = vadd.xlane.f32.xlu0 %v551
        %v553 = vpop.xlane.xlu0 %552
        %v554 = vrcp.pop %v553
        %v555 = vmul.f32 %v553, %v554
        %v556 = vsub.f32 1.0, %v555
        %v557 = vmul.f32 %v554, %v556
        %v558 = vadd.f32 %v554, %v557
        %vm559 = vweird.f32 %v553
        %vm560 = vweird.f32 %v554
        %vm561 = vmor %vm559, %vm560
        %v562 = vsel %vm561, %v554, %v558
        %v563 = vand.u32 2147483647, %v553
        %vm564 = vcmp.eq.f32.partialorder %v563, 8.507059e+37
        %v565 = vand.u32 %v553, 2147483648
        %v566 = vor.u32 1.1754944e-38, %v565
        %v567 = vsel %vm564, %v566, %v562
        %v568 = vmul.f32 %v550, %v567
        %v570 = vsel %vm518, %v568, 0
        %572 = vmatpush.msra.mxu0 0.0
        %573 = vmatpush.msra.mxu0 0.0
        %574 = vmatpush.msra.mxu0 0.0
        %575 = vmatpush.msra.mxu0 0.0
        %576 = vmatpush.msra.mxu0 0.0
        %577 = vmatpush.msra.mxu0 0.0
        %578 = vmatpush.msra.mxu0 0.0
        %579 = vmatpush.msra.mxu0 0.0
        %580 = vmatpush.msra.mxu0 0.0
        %581 = vmatpush.msra.mxu0 0.0
        %582 = vmatpush.msra.mxu0 0.0
        %583 = vmatpush.msra.mxu0 0.0
        %584 = vmatpush.msra.mxu0 0.0
        %585 = vmatpush.msra.mxu0 0.0
        %586 = vmatpush.msra.mxu0 0.0
        %587 = vmatpush.msra.mxu0 %v514
        %588 = vmatmul.f32.gmra.mxu0 %v570
        %v589 = vpop.f32.mrf.mxu0
        %v590 = vadd.f32 0.0, %v589
        %591 = vdwg.mxu0
        %v592 = vld [vmem:[#allocation2] sm:$0xff]
        %v593 = vld [vmem:[%s423] sm:$0xff]
        %v595 = vsel %vm518, %v590, 0
        %597 = vmatpush.msra.mxu0 0.0
        %598 = vmatpush.msra.mxu0 0.0
        %599 = vmatpush.msra.mxu0 0.0
        %600 = vmatpush.msra.mxu0 0.0
        %601 = vmatpush.msra.mxu0 0.0
        %602 = vmatpush.msra.mxu0 0.0
        %603 = vmatpush.msra.mxu0 0.0
        %604 = vmatpush.msra.mxu0 0.0
        %605 = vmatpush.msra.mxu0 0.0
        %606 = vmatpush.msra.mxu0 0.0
        %607 = vmatpush.msra.mxu0 0.0
        %608 = vmatpush.msra.mxu0 0.0
        %609 = vmatpush.msra.mxu0 0.0
        %610 = vmatpush.msra.mxu0 0.0
        %611 = vmatpush.msra.mxu0 0.0
        %612 = vmatpush.msra.mxu0 %v593
        %613 = vmatmul.f32.gmra.mxu0 %v595
        %v614 = vpop.f32.mrf.mxu0
        %v615 = vadd.f32 0.0, %v614
        %616 = vdwg.mxu0
        %v617 = vadd.f32 %v592, %v615
        %618 = vst.msk [vmem:[#allocation2] sm:$0xff] %vm437, %v617
        %p619 = scmp.eq.s32.totalorder %s27, 3
        // Predicated region
        $region57: #{tpu_custom_call.1} parent=51 // pred_check
          %p620 = pneg %p619
        $region58: #{tpu_custom_call.1} parent=51 // pred_check_branch
          %622 = sbr.rel (%p620) target = $region60
        $region59: #{tpu_custom_call.1} parent=51 // pred_region
          %v623 = vld [vmem:[#allocation2] sm:$0xff]
          %624 = vst.msk [vmem:[%s392] sm:$0xff] %vm437, %v623
        $region60: #{tpu_custom_call.1} parent=51 // pred_fallthru
          _
        %s625 = sand.u32 %s245, 1
        %s626 = scalar_lea.sflag [#allocation4], %s625
        %s627 = sand.u32 %s245, 1
        %s628 = smul.addr %s627, 8
        %s629 = scalar_lea.vmem [#allocation3], %s628
        // Predicated region
        $region61: #{tpu_custom_call.1} parent=51 // pred_check
          %p630 = pneg %p255
        $region62: #{tpu_custom_call.1} parent=51 // pred_check_branch
          %632 = sbr.rel (%p630) target = $region64
        $region63: #{tpu_custom_call.1} parent=51 // pred_region
          %634 = vsyncadd %s626, 0
          %s635 = smul.addr %s26, 8
          %s636 = scalar_lea.hbm %s8, %s635
          %s638 = sshll.u32 %s629, 4
          %s639 = int_to_ptr.vmem [resolvable:$true] %s638
          %s640 = sshll.u32 %s636, 4
          %s641 = int_to_ptr.hbm [resolvable:$true] %s640
          %643 = dma.vmem_to_hbm [thread:$0]  %s639, 128, %s641, %s626
        $region64: #{tpu_custom_call.1} parent=51 // pred_fallthru
          _
      $region52: #{tpu_custom_call.1} parent=5 // pred_fallthru
        _
      %p644 = scmp.le.s32.totalorder 2, %s17
      // Predicated region
      $region65: #{tpu_custom_call.1} parent=5 // pred_check
        %p645 = pneg %p644
      $region66: #{tpu_custom_call.1} parent=5 // pred_check_branch
        %647 = sbr.rel (%p645) target = $region68
      $region67: #{tpu_custom_call.1} parent=5 // pred_region
        %s648 = ssub.s32 %s17, 2
        // Predicated region
        $region69: #{tpu_custom_call.1} parent=67 // pred_check
          %p649 = pneg %p261
        $region70: #{tpu_custom_call.1} parent=67 // pred_check_branch
          %651 = sbr.rel (%p649) target = $region72
        $region71: #{tpu_custom_call.1} parent=67 // pred_region
          %s652 = sand.u32 %s246, 1
          %s653 = scalar_lea.sflag [#allocation4], %s652
          %s654 = sand.u32 %s246, 1
          %s655 = smul.addr %s654, 8
          %s656 = scalar_lea.vmem [#allocation3], %s655
          %658 = dma.done %s653, 128
        $region72: #{tpu_custom_call.1} parent=67 // pred_fallthru
          _
      $region68: #{tpu_custom_call.1} parent=5 // pred_fallthru
        _
    $region6: #{tpu_custom_call.1} parent=1 // loop_footer
      %s21 = sadd.s32 1, %s17
    $region7: #{tpu_custom_call.1} parent=1 // loop_footer_branch
      %16 = sbr.rel target = $region3
    $region8: #{tpu_custom_call.1} parent=1 // loop_exit
      _
    %659 = vsyncpa [#allocation4], 1
    %s660 = scalar_lea.sflag [#allocation4], 1
    %661 = vsyncpa %s660, 1

</llo_original>
